<compile_context>
chip_gen: v5e
topology: v5e:2x2
jax: 0.10.0
libtpu: 0.0.40
codegen_flags: <defaults>
</compile_context>

<pallas_src>
import functools

import jax
import jax.numpy as jnp
from jax.experimental import pallas as pl
from jax.experimental.pallas import tpu as pltpu


def _sigmoid_kernel(x_ref, o_ref, *, compute_dtype):
    # sigmoid(x) = 0.5 * (tanh(x/2) + 1): the transcendental rides the EUP slot
    # and there is no VPU divide, so the VALU never becomes the binding unit.
    # compute_dtype is f32 everywhere except bf16 inputs on chips with a bf16
    # EUP/VPU (v6e/v7x); HBM traffic stays in the narrow storage dtype.
    x = x_ref[...].astype(compute_dtype)
    y = 0.5 * (jnp.tanh(0.5 * x) + 1.0)
    o_ref[...] = y.astype(o_ref.dtype)


# Lane widths to try (largest first); all multiples of 128 -> unmasked,
# lane-dense vector stores and long contiguous DMA bursts.
_LANE_CANDIDATES = (32768, 16384, 8192, 4096, 2048, 1024, 512, 256, 128)

# ~8 MiB per block: with double-buffered input + output that is ~32 MiB of
# pipelined VMEM.  We raise the scoped-VMEM limit explicitly to 48 MiB, which
# is above v5e's 16 MiB default, within v6e's 128 MiB physical, and safely
# below v7x's 64 MiB physical per TensorCore.
_TARGET_BLOCK_BYTES = 8 * 1024 * 1024
_VMEM_LIMIT_BYTES = 48 * 1024 * 1024

# Lane chunk for the ragged (non-multiple-of-128) fallback path.
_FALLBACK_CHUNK = 64 * 1024


def _device_kind():
    try:
        return jax.devices()[0].device_kind.lower()
    except Exception:  # pragma: no cover - defensive; default to conservative path
        return ""


def _is_multi_tensorcore(kind):
    """Chips whose TensorCores share one grid via 'parallel' semantics."""
    if "lite" in kind or "v5e" in kind or "v6e" in kind:
        return False  # single TensorCore per device
    return any(tag in kind for tag in ("v4", "v5p", "v7", "7x"))


def _has_bf16_eup(kind):
    """v6e and newer have a bf16 VPU/EUP; v5e and older do not."""
    return any(tag in kind for tag in ("v6", "v7", "7x"))


def _sublane_multiple(dtype):
    """Packed-sublane multiple: 8 for f32, 16 for bf16, 32 for int8/fp8."""
    return max(8, 32 // jnp.dtype(dtype).itemsize)


def _choose_lane_width(n, min_rows):
    """Largest lane width L (multiple of 128) dividing n, preferring dense sublanes."""
    best = None
    for lane in _LANE_CANDIDATES:
        if n % lane == 0:
            if best is None:
                best = lane
            if n // lane >= min_rows:
                return lane
    return best  # None if n is not a multiple of 128 (ragged fallback path)


def _cost_estimate(n, itemsize):
    return pl.CostEstimate(
        flops=2 * n,              # mul + add per element (tanh counted below)
        transcendentals=n,        # one tanh per element
        bytes_accessed=2 * n * itemsize,
    )


def _compiler_params():
    return pltpu.CompilerParams(
        dimension_semantics=("parallel",),
        vmem_limit_bytes=_VMEM_LIMIT_BYTES,
    )


def _sigmoid_2d(x2d, *, compute_dtype, multi_tc, donate_input):
    """Lane-dense path: element count is a multiple of 128."""
    rows, lanes = x2d.shape
    itemsize = x2d.dtype.itemsize
    sub = _sublane_multiple(x2d.dtype)

    if rows <= sub:
        # Block row dim equals the full array dim: always legal.
        tile_r = rows
    else:
        # Rows per block sized by bytes, rounded to the packed-sublane multiple.
        tile_r = (_TARGET_BLOCK_BYTES // (lanes * itemsize)) // sub * sub
        tile_r = max(sub, min(rows, tile_r))

        # Only on multi-TensorCore chips (v4/v5p megacore, v7x): make sure the
        # "parallel" row axis has >= 2 grid steps so both cores receive work.
        # On single-TC v5e/v6e the grid is a sequential loop -> no forced split.
        if multi_tc and pl.cdiv(rows, tile_r) < 2 and rows >= 2 * sub:
            tile_r = max(sub, ((rows + 1) // 2 + sub - 1) // sub * sub)

        # Prefer an even number of grid steps on multi-TC chips so the two
        # cores get balanced work.
        steps = pl.cdiv(rows, tile_r)
        if multi_tc and steps > 1 and steps % 2 == 1:
            cand = max(sub, ((pl.cdiv(rows, steps + 1) + sub - 1) // sub) * sub)
            if pl.cdiv(rows, cand) % 2 == 0:
                tile_r = cand

    grid = (pl.cdiv(rows, tile_r),)
    n = rows * lanes

    kwargs = {}
    if donate_input:
        # Reuse the input HBM buffer for the output (same shape & dtype).
        # NOTE: only a real saving if the caller truly donates x (e.g. via
        # jax.jit donate_argnums); otherwise XLA silently inserts a copy.
        kwargs["input_output_aliases"] = {0: 0}

    return pl.pallas_call(
        functools.partial(_sigmoid_kernel, compute_dtype=compute_dtype),
        out_shape=jax.ShapeDtypeStruct((rows, lanes), x2d.dtype),
        grid_spec=pltpu.PrefetchScalarGridSpec(
            num_scalar_prefetch=0,
            grid=grid,
            in_specs=[pl.BlockSpec((tile_r, lanes), lambda i: (i, 0))],
            out_specs=pl.BlockSpec((tile_r, lanes), lambda i: (i, 0)),
        ),
        compiler_params=_compiler_params(),
        cost_estimate=_cost_estimate(n, itemsize),
        **kwargs,
    )(x2d)


def _sigmoid_ragged(flat, *, compute_dtype):
    """Fallback for element counts not divisible by 128.

    Grid over lane-aligned chunks of the flat vector; Pallas masks the partial
    final block, so total HBM traffic stays at exactly 1 read + 1 write (the
    old jnp.pad + slice version cost ~3x).
    """
    n = flat.shape[0]
    x2d = flat.reshape(1, n)
    if n <= _FALLBACK_CHUNK:
        block = (1, n)                 # full-array block: always legal
        grid = (1,)
    else:
        block = (1, _FALLBACK_CHUNK)   # lane-chunked; ragged last block masked
        grid = (pl.cdiv(n, _FALLBACK_CHUNK),)

    out = pl.pallas_call(
        functools.partial(_sigmoid_kernel, compute_dtype=compute_dtype),
        out_shape=jax.ShapeDtypeStruct((1, n), flat.dtype),
        grid_spec=pltpu.PrefetchScalarGridSpec(
            num_scalar_prefetch=0,
            grid=grid,
            in_specs=[pl.BlockSpec(block, lambda i: (0, i))],
            out_specs=pl.BlockSpec(block, lambda i: (0, i)),
        ),
        compiler_params=_compiler_params(),
        cost_estimate=_cost_estimate(n, flat.dtype.itemsize),
    )(x2d)
    return out.reshape(n)


def sigmoid_pallas(x, *, donate_input=False):
    """Applies sigmoid elementwise. Accepts any shape; returns same shape/dtype."""
    orig_shape = x.shape
    n = x.size
    if n == 0:
        return x

    kind = _device_kind()
    multi_tc = _is_multi_tensorcore(kind)
    if x.dtype == jnp.bfloat16 and _has_bf16_eup(kind):
        compute_dtype = jnp.bfloat16   # native bf16 EUP/VPU on v6e/v7x
    else:
        compute_dtype = jnp.float32

    flat = x.reshape(-1)  # pure layout reshape for a contiguous array
    lanes = _choose_lane_width(n, _sublane_multiple(x.dtype))
    if lanes is not None:
        out = _sigmoid_2d(
            flat.reshape(n // lanes, lanes),
            compute_dtype=compute_dtype,
            multi_tc=multi_tc,
            donate_input=donate_input,
        )
        return out.reshape(orig_shape)

    out = _sigmoid_ragged(flat, compute_dtype=compute_dtype)
    return out.reshape(orig_shape)


class Activation:
    """Pallas TPU equivalent of the PyTorch `Activation` module (nn.Sigmoid)."""

    def __call__(self, x):
        return sigmoid_pallas(x)


if __name__ == "__main__":
    key = jax.random.PRNGKey(0)
    # NCHW input, consistent with typical segmentation usage.
    x = jax.random.normal(key, (2, 4, 16, 16), dtype=jnp.float32)

    act = Activation()
    y = jax.block_until_ready(act(x))

    y_ref = jax.nn.sigmoid(x)
    assert y.shape == x.shape and y.dtype == x.dtype
    assert jnp.allclose(y, y_ref, atol=1e-5), "mismatch vs reference sigmoid"

    # Also exercise the ragged (non-multiple-of-128) fallback path.
    x_odd = jax.random.normal(jax.random.PRNGKey(1), (3, 5, 7), dtype=jnp.float32)
    y_odd = jax.block_until_ready(sigmoid_pallas(x_odd))
    assert jnp.allclose(y_odd, jax.nn.sigmoid(x_odd), atol=1e-5), "ragged path mismatch"

    print("KERNEL_OK")
</pallas_src>

<mosaic_0001>
module attributes {stable_mosaic.version = 11 : i64} {
  func.func @_sigmoid_kernel(%arg0: i32, %arg1: memref<8x256xf32, #tpu.memory_space<vmem>>, %arg2: memref<8x256xf32, #tpu.memory_space<vmem>>) attributes {dimension_semantics = [#tpu.dimension_semantics<parallel>], iteration_bounds = array<i64: 1>, scalar_prefetch = 0 : i64, scratch_operands = 0 : i64, tpu.core_type = #tpu.core_type<tc>, window_params = [{transform_indices = @transform_0, window_bounds = array<i64: 8, 256>}, {transform_indices = @transform_1, window_bounds = array<i64: 8, 256>}]} {
    %c0 = arith.constant 0 : index
    %c0_0 = arith.constant 0 : index
    %0 = vector.load %arg1[%c0, %c0_0] : memref<8x256xf32, #tpu.memory_space<vmem>>, vector<8x256xf32>
    %cst = arith.constant 5.000000e-01 : f32
    %1 = vector.broadcast %cst : f32 to vector<8x256xf32>
    %2 = arith.mulf %1, %0 : vector<8x256xf32>
    %3 = math.tanh %2 : vector<8x256xf32>
    %cst_1 = arith.constant 1.000000e+00 : f32
    %4 = vector.broadcast %cst_1 : f32 to vector<8x256xf32>
    %5 = arith.addf %3, %4 : vector<8x256xf32>
    %cst_2 = arith.constant 5.000000e-01 : f32
    %6 = vector.broadcast %cst_2 : f32 to vector<8x256xf32>
    %7 = arith.mulf %6, %5 : vector<8x256xf32>
    %c0_3 = arith.constant 0 : index
    %c0_4 = arith.constant 0 : index
    %8 = vector.load %arg2[%c0_3, %c0_4] : memref<8x256xf32, #tpu.memory_space<vmem>>, vector<8x256xf32>
    tpu.vector_store %arg2[%c0_3, %c0_4], %7 {strides = array<i32>} : memref<8x256xf32, #tpu.memory_space<vmem>>, vector<8x256xf32>,
    return
  }
  func.func @transform_0(%arg0: i32) -> (i32, i32) {
    %c0_i32 = arith.constant 0 : i32
    %c0_i32_0 = arith.constant 0 : i32
    return %arg0, %c0_i32 : i32, i32
  }
  func.func @transform_1(%arg0: i32) -> (i32, i32) {
    %c0_i32 = arith.constant 0 : i32
    %c0_i32_0 = arith.constant 0 : i32
    return %arg0, %c0_i32 : i32, i32
  }
}

</mosaic_0001>

<llo_original>
// kernel: tpu_custom_call.1
$region0: #{tpu_custom_call.1}
  #allocation0 [shape = 'u32[]', space=smem, size = 0x4, offset = 0x4, fixed_abs, tag = 'smem constant byte address 0x4 - core index']
  #allocation1 [shape = 'u32[72,128]{1,0:T(1,128)}', space=vmem, size = 0x9000, scoped, tag = 'internal scratch']
  %s0 = inlined_call_operand.hbm [shape: f32[8,256], index: 0, kind: input, shape index: {}]
  %s1 = inlined_call_operand.hbm [shape: f32[8,256], index: 1, kind: output, shape index: {}]
  %s2 = sld [smem:[#allocation0]]
  $region18: #{tpu_custom_call.1} parent=0
    _
  %s4 = ssub.s32 1, %s2
  %s5 = scalar_select 0, %s4, %s2
  $region1: #{tpu_custom_call.1} parent=0
    #allocation2 [shape = 'u8[8192]{0}', space=vmem, size = 0x2000, scoped, tag = 'input window, operand 0, single buffered']
    #allocation3 [shape = 's32[1]{0}', space=sflag, size = 0x4, scoped, tag = 'scoped memory for tpu_custom_call.1']
    #allocation4 [shape = 's32[1]{0}', space=sflag, size = 0x4, scoped, tag = 'scoped memory for tpu_custom_call.1']
    #allocation5 [shape = 'u8[8192]{0}', space=vmem, size = 0x2000, scoped, tag = 'output window, operand 0, single buffered']
    %6 = vsyncpa [#allocation3], 0
    %7 = vsyncpa [#allocation4], 0
    // Predicated region
    $region2: #{tpu_custom_call.1} parent=1 // pred_check
      _
    $region3: #{tpu_custom_call.1} parent=1 // pred_check_branch
      %9 = sbr.rel (0) target = $region5
    $region4: #{tpu_custom_call.1} parent=1 // pred_region
      %11 = vsyncadd [#allocation3], 0
      %s13 = sshll.u32 %s0, 4
      %s14 = int_to_ptr.hbm [resolvable:$true] %s13
      %s15 = sshll.u32 [#allocation2], 4
      %s16 = int_to_ptr.vmem [resolvable:$true] %s15
      %18 = dma.hbm_to_vmem [thread:$0]  %s14, 256, %s16, [#allocation3]
    $region5: #{tpu_custom_call.1} parent=1 // pred_fallthru
      _
    // Predicated region
    $region6: #{tpu_custom_call.1} parent=1 // pred_check
      _
    $region7: #{tpu_custom_call.1} parent=1 // pred_check_branch
      %20 = sbr.rel (0) target = $region9
    $region8: #{tpu_custom_call.1} parent=1 // pred_region
      %22 = dma.done [#allocation3], 256
    $region9: #{tpu_custom_call.1} parent=1 // pred_fallthru
      _
    %v23 = vld [vmem:[#allocation2] sm:$0xff]
    %v24 = vld [vmem:[#allocation2 + $0x8] sm:$0xff]
    %v25 = vmul.f32 %v23, 0.5
    %v26 = vmul.f32 %v24, 0.5
    %v27 = vtanh.pop %v25
    %v28 = vtanh.pop %v26
    %v29 = vadd.f32 %v27, 1.0
    %v30 = vadd.f32 %v28, 1.0
    %v31 = vmul.f32 %v29, 0.5
    %v32 = vmul.f32 %v30, 0.5
    %33 = vst [vmem:[#allocation5] sm:$0xff] %v31
    %34 = vst [vmem:[#allocation5 + $0x8] sm:$0xff] %v32
    // Predicated region
    $region10: #{tpu_custom_call.1} parent=1 // pred_check
      _
    $region11: #{tpu_custom_call.1} parent=1 // pred_check_branch
      %36 = sbr.rel (0) target = $region13
    $region12: #{tpu_custom_call.1} parent=1 // pred_region
      %38 = vsyncadd [#allocation4], 0
      %s40 = sshll.u32 [#allocation5], 4
      %s41 = int_to_ptr.vmem [resolvable:$true] %s40
      %s42 = sshll.u32 %s1, 4
      %s43 = int_to_ptr.hbm [resolvable:$true] %s42
      %45 = dma.vmem_to_hbm [thread:$0]  %s41, 256, %s43, [#allocation4]
    $region13: #{tpu_custom_call.1} parent=1 // pred_fallthru
      _
    // Predicated region
    $region14: #{tpu_custom_call.1} parent=1 // pred_check
      _
    $region15: #{tpu_custom_call.1} parent=1 // pred_check_branch
      %47 = sbr.rel (0) target = $region17
    $region16: #{tpu_custom_call.1} parent=1 // pred_region
      %49 = dma.done [#allocation4], 256
    $region17: #{tpu_custom_call.1} parent=1 // pred_fallthru
      _
    %50 = vsyncpa [#allocation3], 1
    %51 = vsyncpa [#allocation4], 1

</llo_original>
